<compile_context>
chip_gen: v7x
topology: tpu7x:2x2x1
jax: 0.10.0
libtpu: 0.0.40
codegen_flags: <defaults>
</compile_context>

<pallas_src>
import functools

import jax
import jax.numpy as jnp
from jax import lax
from jax.experimental import pallas as pl
from jax.experimental.pallas import tpu as pltpu

_LANES = 128
_SUBLANES = 8


def _round_up(x, m):
    return (x + m - 1) // m * m


def _dream_loss_kernel(adv_ref, clean_ref, y_ref, out_ref, *, p, b_actual):
    """One batch tile -> partial sums of the three losses.

    adv_ref/clean_ref: (TILE_B, C_pad) input-dtype tiles.
    y_ref:             (TILE_B, 1) int32 labels.
    out_ref:           (1, 8, 128) f32; [0,0,0]=sum(ce), [0,0,1]=sum(margin2+),
                       [0,0,2]=sum(margin3+), rest zero.
    """
    adv = adv_ref[...].astype(jnp.float32)      # (TB, Cp)
    clean = clean_ref[...].astype(jnp.float32)  # (TB, Cp)
    y = y_ref[...]                              # (TB, 1) int32

    tb, cp = adv.shape
    class_ids = lax.broadcasted_iota(jnp.int32, (tb, cp), 1)
    hit = class_ids == y                         # one True per valid row

    # Rows beyond the real batch (padding) must contribute zero.
    row_ids = pl.program_id(0) * tb + lax.broadcasted_iota(jnp.int32, (tb, 1), 0)
    valid = row_ids < b_actual                   # (TB, 1) bool

    # Correct-class logit via masked max (reuses the boolean mask for both arrays).
    neg_inf = jnp.float32(-jnp.inf)
    correct_adv = jnp.max(jnp.where(hit, adv, neg_inf), axis=1, keepdims=True)
    correct_clean = jnp.max(jnp.where(hit, clean, neg_inf), axis=1, keepdims=True)

    # loss1: numerically stable cross entropy per row.
    max_adv = jnp.max(adv, axis=1, keepdims=True)
    lse = max_adv + jnp.log(jnp.sum(jnp.exp(adv - max_adv), axis=1, keepdims=True))
    ce = lse - correct_adv

    # loss2: comp-sum p-margin on adversarial logits.
    margin2 = jnp.maximum(1.0 - (max_adv - correct_adv), 0.0)

    # loss3: p-margin on clean logits.
    max_clean = jnp.max(clean, axis=1, keepdims=True)
    margin3 = jnp.maximum(1.0 - (max_clean - correct_clean) / (p - 1.0), 0.0)

    zero = jnp.float32(0.0)
    s1 = jnp.sum(jnp.where(valid, ce, zero))
    s2 = jnp.sum(jnp.where(valid, margin2, zero))
    s3 = jnp.sum(jnp.where(valid, margin3, zero))

    # Single full-lane, unmasked store of the per-tile partial sums.
    lane = lax.broadcasted_iota(jnp.int32, (1, _SUBLANES, _LANES), 2)
    sub = lax.broadcasted_iota(jnp.int32, (1, _SUBLANES, _LANES), 1)
    first = sub == 0
    tile = jnp.where(first & (lane == 0), s1,
                     jnp.where(first & (lane == 1), s2,
                               jnp.where(first & (lane == 2), s3, zero)))
    out_ref[...] = tile


def dream_loss(logits_adv, logits_clean, y, *, p, weight1, weight2, weight3,
               block_bytes=4 * 1024 * 1024):
    """Dream_Loss scalar. logits_*: (B, C) float (any float dtype), y: (B,) int."""
    B, C = logits_adv.shape
    assert logits_clean.shape == (B, C)
    dtype = logits_adv.dtype
    itemsize = jnp.dtype(dtype).itemsize

    # Pad the class dim to full 128-lane width (large negative keeps max/lse exact).
    c_pad = max(_LANES, _round_up(C, _LANES))

    # Batch tile: largest multiple of 8 rows with one input block <= block_bytes,
    # so 2 inputs x 2 pipeline buffers + f32 temporaries fit v7x's 64 MiB VMEM.
    tile_b = max(_SUBLANES, block_bytes // (c_pad * itemsize))
    tile_b = (tile_b // _SUBLANES) * _SUBLANES
    tile_b = min(tile_b, _round_up(B, _SUBLANES))
    b_pad = _round_up(B, tile_b)
    num_tiles = b_pad // tile_b

    neg = jnp.asarray(-1e30, dtype=dtype)
    def _pad(x):
        x = jnp.pad(x, ((0, 0), (0, c_pad - C)), constant_values=neg)
        return jnp.pad(x, ((0, b_pad - B), (0, 0)))  # padded rows masked in-kernel

    adv_p = _pad(logits_adv)
    clean_p = _pad(logits_clean)
    y_p = jnp.pad(y.astype(jnp.int32), (0, b_pad - B)).reshape(b_pad, 1)

    kernel = functools.partial(_dream_loss_kernel, p=float(p), b_actual=B)

    partials = pl.pallas_call(
        kernel,
        out_shape=jax.ShapeDtypeStruct((num_tiles, _SUBLANES, _LANES), jnp.float32),
        grid=(num_tiles,),
        in_specs=[
            pl.BlockSpec((tile_b, c_pad), lambda i: (i, 0)),
            pl.BlockSpec((tile_b, c_pad), lambda i: (i, 0)),
            pl.BlockSpec((tile_b, 1), lambda i: (i, 0)),
        ],
        out_specs=pl.BlockSpec((1, _SUBLANES, _LANES), lambda i: (i, 0, 0)),
        compiler_params=pltpu.CompilerParams(
            dimension_semantics=("parallel",),
            vmem_limit_bytes=48 * 1024 * 1024,
        ),
    )(adv_p, clean_p, y_p)

    sums = jnp.sum(partials[:, 0, :3], axis=0)  # (sum_ce, sum_m2, sum_m3)
    return (float(weight1) * sums[0]
            + float(weight2) * sums[1]
            + float(weight3) * sums[2]) / B


def _reference(logits_adv, logits_clean, y, *, p, w1, w2, w3):
    """Pure-JAX reference mirroring the PyTorch module."""
    la = logits_adv.astype(jnp.float32)
    lc = logits_clean.astype(jnp.float32)
    lse = jax.scipy.special.logsumexp(la, axis=1)
    correct_adv = jnp.take_along_axis(la, y[:, None], axis=1)[:, 0]
    loss1 = jnp.mean(lse - correct_adv)
    max_adv = jnp.max(la, axis=1)
    loss2 = jnp.mean(jnp.maximum(1.0 - (max_adv - correct_adv), 0.0))
    correct_clean = jnp.take_along_axis(lc, y[:, None], axis=1)[:, 0]
    max_clean = jnp.max(lc, axis=1)
    loss3 = jnp.mean(jnp.maximum(1.0 - (max_clean - correct_clean) / (p - 1.0), 0.0))
    return w1 * loss1 + w2 * loss2 + w3 * loss3


if __name__ == "__main__":
    # Deterministic config (the module's __init__ only stores these scalars).
    P2 = 4.0
    W1, W2, W3 = 1.0, 0.5, 0.25

    B, C = 8, 16  # batch, num classes (small test shapes)
    key = jax.random.PRNGKey(0)
    k1, k2, k3 = jax.random.split(key, 3)
    logits_adv = jax.random.normal(k1, (B, C), dtype=jnp.float32)
    logits_clean = jax.random.normal(k2, (B, C), dtype=jnp.float32)
    y = jax.random.randint(k3, (B,), 0, C, dtype=jnp.int32)

    out = dream_loss(logits_adv, logits_clean, y,
                     p=P2, weight1=W1, weight2=W2, weight3=W3)
    out = jax.block_until_ready(out)

    ref = _reference(logits_adv, logits_clean, y, p=P2, w1=W1, w2=W2, w3=W3)
    assert jnp.allclose(out, ref, rtol=1e-5, atol=1e-5), (out, ref)

    print("KERNEL_OK")
</pallas_src>

<mosaic_0001>
module attributes {stable_mosaic.version = 11 : i64} {
  func.func @_dream_loss_kernel(%arg0: i32, %arg1: memref<8x128xf32, #tpu.memory_space<vmem>>, %arg2: memref<8x128xf32, #tpu.memory_space<vmem>>, %arg3: memref<8x1xi32, #tpu.memory_space<vmem>>, %arg4: memref<1x8x128xf32, #tpu.memory_space<vmem>>) attributes {dimension_semantics = [#tpu.dimension_semantics<parallel>], iteration_bounds = array<i64: 1>, scalar_prefetch = 0 : i64, scratch_operands = 0 : i64, tpu.core_type = #tpu.core_type<tc>, window_params = [{transform_indices = @transform_0, window_bounds = array<i64: 8, 128>}, {transform_indices = @transform_1, window_bounds = array<i64: 8, 128>}, {transform_indices = @transform_2, window_bounds = array<i64: 8, 1>}, {transform_indices = @transform_3, window_bounds = array<i64: 1, 8, 128>}]} {
    %c0 = arith.constant 0 : index
    %c0_0 = arith.constant 0 : index
    %0 = vector.load %arg1[%c0, %c0_0] : memref<8x128xf32, #tpu.memory_space<vmem>>, vector<8x128xf32>
    %c0_1 = arith.constant 0 : index
    %c0_2 = arith.constant 0 : index
    %1 = vector.load %arg2[%c0_1, %c0_2] : memref<8x128xf32, #tpu.memory_space<vmem>>, vector<8x128xf32>
    %c0_3 = arith.constant 0 : index
    %c0_4 = arith.constant 0 : index
    %2 = vector.load %arg3[%c0_3, %c0_4] : memref<8x1xi32, #tpu.memory_space<vmem>>, vector<8x1xi32>
    %3 = tpu.iota {dimensions = array<i32: 1>} : vector<8x128xi32>
    %4 = vector.broadcast %2 : vector<8x1xi32> to vector<8x128xi32>
    %5 = arith.cmpi eq, %3, %4 : vector<8x128xi32>
    %c8_i32 = arith.constant 8 : i32
    %6 = arith.muli %arg0, %c8_i32 : i32
    %7 = tpu.iota {dimensions = array<i32: 0>} : vector<8x1xi32>
    %8 = vector.broadcast %6 : i32 to vector<8x1xi32>
    %9 = arith.addi %8, %7 : vector<8x1xi32>
    %c8_i32_5 = arith.constant 8 : i32
    %10 = vector.broadcast %c8_i32_5 : i32 to vector<8x1xi32>
    %11 = arith.cmpi slt, %9, %10 : vector<8x1xi32>
    %cst = arith.constant 0xFF800000 : f32
    %12 = vector.broadcast %cst : f32 to vector<8x128xf32>
    %13 = arith.select %5, %0, %12 : vector<8x128xi1>, vector<8x128xf32>
    %cst_6 = arith.constant dense<0xFF800000> : vector<8xf32>
    %14 = vector.multi_reduction <maximumf>, %13, %cst_6 [1] : vector<8x128xf32> to vector<8xf32>
    %15 = vector.shape_cast %14 : vector<8xf32> to vector<8x1xf32>
    %cst_7 = arith.constant 0xFF800000 : f32
    %16 = vector.broadcast %cst_7 : f32 to vector<8x128xf32>
    %17 = arith.select %5, %1, %16 : vector<8x128xi1>, vector<8x128xf32>
    %cst_8 = arith.constant dense<0xFF800000> : vector<8xf32>
    %18 = vector.multi_reduction <maximumf>, %17, %cst_8 [1] : vector<8x128xf32> to vector<8xf32>
    %19 = vector.shape_cast %18 : vector<8xf32> to vector<8x1xf32>
    %cst_9 = arith.constant dense<0xFF800000> : vector<8xf32>
    %20 = vector.multi_reduction <maximumf>, %0, %cst_9 [1] : vector<8x128xf32> to vector<8xf32>
    %21 = vector.shape_cast %20 : vector<8xf32> to vector<8x1xf32>
    %22 = vector.broadcast %21 : vector<8x1xf32> to vector<8x128xf32>
    %23 = arith.subf %0, %22 : vector<8x128xf32>
    %24 = math.exp %23 : vector<8x128xf32>
    %cst_10 = arith.constant dense<0.000000e+00> : vector<8xf32>
    %25 = vector.multi_reduction <add>, %24, %cst_10 [1] : vector<8x128xf32> to vector<8xf32>
    %26 = vector.shape_cast %25 : vector<8xf32> to vector<8x1xf32>
    %27 = math.log %26 : vector<8x1xf32>
    %28 = arith.addf %21, %27 : vector<8x1xf32>
    %29 = arith.subf %28, %15 : vector<8x1xf32>
    %30 = arith.subf %21, %15 : vector<8x1xf32>
    %cst_11 = arith.constant 1.000000e+00 : f32
    %31 = vector.broadcast %cst_11 : f32 to vector<8x1xf32>
    %32 = arith.subf %31, %30 : vector<8x1xf32>
    %cst_12 = arith.constant 0.000000e+00 : f32
    %33 = vector.broadcast %cst_12 : f32 to vector<8x1xf32>
    %34 = arith.maximumf %32, %33 : vector<8x1xf32>
    %cst_13 = arith.constant dense<0xFF800000> : vector<8xf32>
    %35 = vector.multi_reduction <maximumf>, %1, %cst_13 [1] : vector<8x128xf32> to vector<8xf32>
    %36 = vector.shape_cast %35 : vector<8xf32> to vector<8x1xf32>
    %37 = arith.subf %36, %19 : vector<8x1xf32>
    %cst_14 = arith.constant 3.000000e+00 : f32
    %38 = vector.broadcast %cst_14 : f32 to vector<8x1xf32>
    %39 = arith.divf %37, %38 : vector<8x1xf32>
    %cst_15 = arith.constant 1.000000e+00 : f32
    %40 = vector.broadcast %cst_15 : f32 to vector<8x1xf32>
    %41 = arith.subf %40, %39 : vector<8x1xf32>
    %cst_16 = arith.constant 0.000000e+00 : f32
    %42 = vector.broadcast %cst_16 : f32 to vector<8x1xf32>
    %43 = arith.maximumf %41, %42 : vector<8x1xf32>
    %cst_17 = arith.constant 0.000000e+00 : f32
    %44 = vector.broadcast %cst_17 : f32 to vector<8x1xf32>
    %45 = arith.select %11, %29, %44 : vector<8x1xi1>, vector<8x1xf32>
    %46 = vector.shape_cast %45 : vector<8x1xf32> to vector<1x8x1xf32>
    %cst_18 = arith.constant dense<0.000000e+00> : vector<1xf32>
    %47 = vector.multi_reduction <add>, %46, %cst_18 [1, 2] : vector<1x8x1xf32> to vector<1xf32>
    %48 = vector.shape_cast %47 : vector<1xf32> to vector<1x1x1xf32>
    %49 = vector.extract %48[0, 0, 0] : f32 from vector<1x1x1xf32>
    %cst_19 = arith.constant 0.000000e+00 : f32
    %50 = vector.broadcast %cst_19 : f32 to vector<8x1xf32>
    %51 = arith.select %11, %34, %50 : vector<8x1xi1>, vector<8x1xf32>
    %52 = vector.shape_cast %51 : vector<8x1xf32> to vector<1x8x1xf32>
    %cst_20 = arith.constant dense<0.000000e+00> : vector<1xf32>
    %53 = vector.multi_reduction <add>, %52, %cst_20 [1, 2] : vector<1x8x1xf32> to vector<1xf32>
    %54 = vector.shape_cast %53 : vector<1xf32> to vector<1x1x1xf32>
    %55 = vector.extract %54[0, 0, 0] : f32 from vector<1x1x1xf32>
    %cst_21 = arith.constant 0.000000e+00 : f32
    %56 = vector.broadcast %cst_21 : f32 to vector<8x1xf32>
    %57 = arith.select %11, %43, %56 : vector<8x1xi1>, vector<8x1xf32>
    %58 = vector.shape_cast %57 : vector<8x1xf32> to vector<1x8x1xf32>
    %cst_22 = arith.constant dense<0.000000e+00> : vector<1xf32>
    %59 = vector.multi_reduction <add>, %58, %cst_22 [1, 2] : vector<1x8x1xf32> to vector<1xf32>
    %60 = vector.shape_cast %59 : vector<1xf32> to vector<1x1x1xf32>
    %61 = vector.extract %60[0, 0, 0] : f32 from vector<1x1x1xf32>
    %62 = tpu.iota {dimensions = array<i32: 2>} : vector<1x8x128xi32>
    %63 = tpu.iota {dimensions = array<i32: 1>} : vector<1x8x128xi32>
    %c0_i32 = arith.constant 0 : i32
    %64 = vector.broadcast %c0_i32 : i32 to vector<1x8x128xi32>
    %65 = arith.cmpi eq, %63, %64 : vector<1x8x128xi32>
    %c0_i32_23 = arith.constant 0 : i32
    %66 = vector.broadcast %c0_i32_23 : i32 to vector<1x8x128xi32>
    %67 = arith.cmpi eq, %62, %66 : vector<1x8x128xi32>
    %68 = arith.andi %65, %67 : vector<1x8x128xi1>
    %c1_i32 = arith.constant 1 : i32
    %69 = vector.broadcast %c1_i32 : i32 to vector<1x8x128xi32>
    %70 = arith.cmpi eq, %62, %69 : vector<1x8x128xi32>
    %71 = arith.andi %65, %70 : vector<1x8x128xi1>
    %c2_i32 = arith.constant 2 : i32
    %72 = vector.broadcast %c2_i32 : i32 to vector<1x8x128xi32>
    %73 = arith.cmpi eq, %62, %72 : vector<1x8x128xi32>
    %74 = arith.andi %65, %73 : vector<1x8x128xi1>
    %cst_24 = arith.constant 0.000000e+00 : f32
    %75 = vector.broadcast %61 : f32 to vector<1x8x128xf32>
    %76 = vector.broadcast %cst_24 : f32 to vector<1x8x128xf32>
    %77 = arith.select %74, %75, %76 : vector<1x8x128xi1>, vector<1x8x128xf32>
    %78 = vector.broadcast %55 : f32 to vector<1x8x128xf32>
    %79 = arith.select %71, %78, %77 : vector<1x8x128xi1>, vector<1x8x128xf32>
    %80 = vector.broadcast %49 : f32 to vector<1x8x128xf32>
    %81 = arith.select %68, %80, %79 : vector<1x8x128xi1>, vector<1x8x128xf32>
    %c0_25 = arith.constant 0 : index
    %c0_26 = arith.constant 0 : index
    %c0_27 = arith.constant 0 : index
    %82 = vector.load %arg4[%c0_25, %c0_26, %c0_27] : memref<1x8x128xf32, #tpu.memory_space<vmem>>, vector<1x8x128xf32>
    tpu.vector_store %arg4[%c0_25, %c0_26, %c0_27], %81 {strides = array<i32>} : memref<1x8x128xf32, #tpu.memory_space<vmem>>, vector<1x8x128xf32>,
    return
  }
  func.func @transform_0(%arg0: i32) -> (i32, i32) {
    %c0_i32 = arith.constant 0 : i32
    %c0_i32_0 = arith.constant 0 : i32
    return %arg0, %c0_i32 : i32, i32
  }
  func.func @transform_1(%arg0: i32) -> (i32, i32) {
    %c0_i32 = arith.constant 0 : i32
    %c0_i32_0 = arith.constant 0 : i32
    return %arg0, %c0_i32 : i32, i32
  }
  func.func @transform_2(%arg0: i32) -> (i32, i32) {
    %c0_i32 = arith.constant 0 : i32
    %c0_i32_0 = arith.constant 0 : i32
    return %arg0, %c0_i32 : i32, i32
  }
  func.func @transform_3(%arg0: i32) -> (i32, i32, i32) {
    %c0_i32 = arith.constant 0 : i32
    %c0_i32_0 = arith.constant 0 : i32
    %c0_i32_1 = arith.constant 0 : i32
    return %arg0, %c0_i32, %c0_i32_0 : i32, i32, i32
  }
}

</mosaic_0001>

<llo_original>
// kernel: tpu_custom_call.1
$region0: #{tpu_custom_call.1}
  #allocation0 [shape = 'u32[]', space=smem, size = 0x4, offset = 0x4, fixed_abs, tag = 'smem constant byte address 0x4 - core index']
  #allocation1 [shape = 'u32[144,128]{1,0:T(1,128)}', space=vmem, size = 0x12000, scoped, tag = 'internal scratch']
  %s0 = inlined_call_operand.vmem [shape: f32[8,128], index: 0, kind: input, shape index: {}]
  %s1 = inlined_call_operand.hbm [shape: f32[8,128], index: 1, kind: input, shape index: {}]
  %s2 = inlined_call_operand.vmem [shape: s32[8,1], index: 2, kind: input, shape index: {}]
  %s3 = inlined_call_operand.hbm [shape: f32[1,8,128], index: 3, kind: output, shape index: {}]
  %s4 = sld [smem:[#allocation0]]
  $region26: #{tpu_custom_call.1} parent=0
    _
  %s6 = ssub.s32 1, %s4
  %s7 = scalar_select 0, %s6, %s4
  $region1: #{tpu_custom_call.1} parent=0
    #allocation2 [shape = 'u8[4096]{0}', space=vmem, size = 0x1000, scoped, tag = 'input window, operand 1, single buffered']
    #allocation3 [shape = 's32[1]{0}', space=sflag, size = 0x4, scoped, tag = 'scoped memory for tpu_custom_call.1']
    #allocation4 [shape = 's32[1]{0}', space=sflag, size = 0x4, scoped, tag = 'scoped memory for tpu_custom_call.1']
    #allocation5 [shape = 'u8[4096]{0}', space=vmem, size = 0x1000, scoped, tag = 'output window, operand 0, single buffered']
    %8 = vsyncpa [#allocation3], 0
    %9 = vsyncpa [#allocation4], 0
    // Predicated region
    $region2: #{tpu_custom_call.1} parent=1 // pred_check
      _
    $region3: #{tpu_custom_call.1} parent=1 // pred_check_branch
      %11 = sbr.rel (0) target = $region5
    $region4: #{tpu_custom_call.1} parent=1 // pred_region
      _
    $region5: #{tpu_custom_call.1} parent=1 // pred_fallthru
      _
    // Predicated region
    $region6: #{tpu_custom_call.1} parent=1 // pred_check
      _
    $region7: #{tpu_custom_call.1} parent=1 // pred_check_branch
      %13 = sbr.rel (0) target = $region9
    $region8: #{tpu_custom_call.1} parent=1 // pred_region
      %s15 = ssub.s32 128, 128
      %16 = vsyncadd [#allocation3], %s15
      %s18 = sshll.u32 [#allocation2], 4
      %s19 = int_to_ptr.vmem [resolvable:$true] %s18
      %21 = dma.hbm_to_vmem [thread:$0]  %s1, 128, %s19, [#allocation3]
    $region9: #{tpu_custom_call.1} parent=1 // pred_fallthru
      _
    // Predicated region
    $region10: #{tpu_custom_call.1} parent=1 // pred_check
      _
    $region11: #{tpu_custom_call.1} parent=1 // pred_check_branch
      %23 = sbr.rel (0) target = $region13
    $region12: #{tpu_custom_call.1} parent=1 // pred_region
      _
    $region13: #{tpu_custom_call.1} parent=1 // pred_fallthru
      _
    // Predicated region
    $region14: #{tpu_custom_call.1} parent=1 // pred_check
      _
    $region15: #{tpu_custom_call.1} parent=1 // pred_check_branch
      %25 = sbr.rel (0) target = $region17
    $region16: #{tpu_custom_call.1} parent=1 // pred_region
      %26 = dma.done [#allocation3], 128
    $region17: #{tpu_custom_call.1} parent=1 // pred_fallthru
      _
    %v27 = vld [vmem:[%s0] sm:$0xff]
    %v28 = vld [vmem:[#allocation2] sm:$0xff]
    %v29 = vld [vmem:[%s2] sm:$0xff]
    %v30 = vlaneseq
    %v31 = vand.u32 %v30, 127
    %32 = vset.pattern.permute.xlu0 0
    %33 = vperm.xlu0 %32, %v29
    %v34 = vpop.permute.xlu0 %33
    %vm35 = vcmp.eq.s32.totalorder %v31, %v34
    %s36 = smul.u32 0, 8
    %v37 = vlaneseq
    %v38 = vshrl.u32 %v37, 7
    %v39 = vstv %s36
    %v40 = vadd.s32 %v39, %v38
    %vm41 = vcmp.lt.s32.totalorder %v40, 8
    %v42 = vsel %vm35, %v27, -inf
    %43 = vmax.xlane.f32.xlu0 %v42
    %v44 = vpop.xlane.xlu0 %43
    %v45 = vsel %vm35, %v28, -inf
    %46 = vmax.xlane.f32.xlu0 %v45
    %v47 = vpop.xlane.xlu0 %46
    %48 = vmax.xlane.f32.xlu0 %v27
    %v49 = vpop.xlane.xlu0 %48
    %v50 = vsub.f32 %v27, %v49
    %v51 = vmul.f32 %v50, 1.442695
    %v52 = vpow.pop %v51
    %53 = vadd.xlane.f32.xlu0 %v52
    %v54 = vpop.xlane.xlu0 %53
    %v55 = vlog2.pop %v54
    %v56 = vmul.f32 %v55, 0.6931472
    %v57 = vadd.f32 %v49, %v56
    %v58 = vsub.f32 %v57, %v44
    %v59 = vsub.f32 %v49, %v44
    %v60 = vsub.f32 1.0, %v59
    %v61 = vmax.f32 %v60, 0.0
    %62 = vmax.xlane.f32.xlu0 %v28
    %v63 = vpop.xlane.xlu0 %62
    %v64 = vsub.f32 %v63, %v47
    %v65 = vrcp.pop 3.0
    %v66 = vmul.f32 %v64, %v65
    %v67 = vsub.f32 1.0, %v66
    %v68 = vmax.f32 %v67, 0.0
    %v69 = vsel %vm41, %v58, 0.0
    %vm70 = vcmask 7168
    %v71 = vsel %vm70, %v69, 0.0
    %72 = vadd.xlane.f32.xlu0 %v71
    %v73 = vpop.xlane.xlu0 %72
    %v74 = vrot.slane %v73, 4
    %v75 = vadd.f32 %v73, %v74
    %v76 = vrot.slane %v75, 2
    %v77 = vadd.f32 %v75, %v76
    %v78 = vrot.slane %v77, 1
    %v79 = vadd.f32 %v77, %v78
    %s80 = vtos %v79
    %v81 = vsel %vm41, %v61, 0.0
    %v82 = vsel %vm70, %v81, 0.0
    %83 = vadd.xlane.f32.xlu0 %v82
    %v84 = vpop.xlane.xlu0 %83
    %v85 = vrot.slane %v84, 4
    %v86 = vadd.f32 %v84, %v85
    %v87 = vrot.slane %v86, 2
    %v88 = vadd.f32 %v86, %v87
    %v89 = vrot.slane %v88, 1
    %v90 = vadd.f32 %v88, %v89
    %s91 = vtos %v90
    %v92 = vsel %vm41, %v68, 0.0
    %v93 = vsel %vm70, %v92, 0.0
    %94 = vadd.xlane.f32.xlu0 %v93
    %v95 = vpop.xlane.xlu0 %94
    %v96 = vrot.slane %v95, 4
    %v97 = vadd.f32 %v95, %v96
    %v98 = vrot.slane %v97, 2
    %v99 = vadd.f32 %v97, %v98
    %v100 = vrot.slane %v99, 1
    %v101 = vadd.f32 %v99, %v100
    %s102 = vtos %v101
    %vm103 = vcmp.eq.s32.totalorder %v38, 0
    %vm104 = vcmp.eq.s32.totalorder %v31, 0
    %vm105 = vmand %vm103, %vm104
    %vm106 = vcmp.eq.s32.totalorder %v31, 1
    %vm107 = vmand %vm103, %vm106
    %vm108 = vcmp.eq.s32.totalorder %v31, 2
    %vm109 = vmand %vm103, %vm108
    %v110 = vstv %s102
    %v111 = vsel %vm109, %v110, 0.0
    %v112 = vstv %s91
    %v113 = vsel %vm107, %v112, %v111
    %v114 = vstv %s80
    %v115 = vsel %vm105, %v114, %v113
    %116 = vst [vmem:[#allocation5] sm:$0xff] %v115
    // Predicated region
    $region18: #{tpu_custom_call.1} parent=1 // pred_check
      _
    $region19: #{tpu_custom_call.1} parent=1 // pred_check_branch
      %118 = sbr.rel (0) target = $region21
    $region20: #{tpu_custom_call.1} parent=1 // pred_region
      %s120 = ssub.s32 128, 128
      %121 = vsyncadd [#allocation4], %s120
      %s123 = sshll.u32 [#allocation5], 4
      %s124 = int_to_ptr.vmem [resolvable:$true] %s123
      %126 = dma.vmem_to_hbm [thread:$0]  %s124, 128, %s3, [#allocation4]
    $region21: #{tpu_custom_call.1} parent=1 // pred_fallthru
      _
    // Predicated region
    $region22: #{tpu_custom_call.1} parent=1 // pred_check
      _
    $region23: #{tpu_custom_call.1} parent=1 // pred_check_branch
      %128 = sbr.rel (0) target = $region25
    $region24: #{tpu_custom_call.1} parent=1 // pred_region
      %129 = dma.done [#allocation4], 128
    $region25: #{tpu_custom_call.1} parent=1 // pred_fallthru
      _
    %130 = vsyncpa [#allocation3], 1
    %131 = vsyncpa [#allocation4], 1

</llo_original>
